<compile_context>
chip_gen: v6e
topology: v6e:2x2x1
jax: 0.10.0
libtpu: 0.0.40
codegen_flags: <defaults>
</compile_context>

<pallas_src>
import functools
import math

import jax
import jax.numpy as jnp
from jax import lax
from jax.experimental import pallas as pl
from jax.experimental.pallas import tpu as pltpu


def _round_up(x, m):
    return ((x + m - 1) // m) * m


# -----------------------------------------------------------------------------
# Kernel 1: shared (modality-invariant) Q / K projection, computed once per batch.
# -----------------------------------------------------------------------------
def _qk_project_kernel(xin_ref, wq_ref, bq_ref, wk_ref, bk_ref, q_ref, k_ref, *, n):
    f32 = jnp.float32
    x = xin_ref[0]                                                     # (N, L+2TE)
    q = jnp.dot(x, wq_ref[...], preferred_element_type=f32) + bq_ref[...]
    k = jnp.dot(x, wk_ref[...], preferred_element_type=f32) + bk_ref[...]
    n_pad = q_ref.shape[1]
    if n < n_pad:                                                      # static padding tail
        zeros = jnp.zeros((n_pad - n, q_ref.shape[2]), f32)
        q_ref[0, n:, :] = zeros
        k_ref[0, n:, :] = zeros
    q_ref[0, :n, :] = q
    k_ref[0, :n, :] = k


# -----------------------------------------------------------------------------
# Kernel 2: per (modality, batch-tile) dynamic-graph construction.
# -----------------------------------------------------------------------------
def _dygraph_kernel(q_ref, k_ref, qe_ref, ke_ref, adj_ref, out_ref, *, k_s, hidden_dim):
    f32 = jnp.float32
    n_pad = adj_ref.shape[-1]

    q = q_ref[...] + qe_ref[...]                                       # (tb, Np, H)
    k = k_ref[...] + ke_ref[...]                                       # (tb, Np, H)
    adj = adj_ref[...]                                                 # (1, Np, Np)

    inv_sqrt_h = 1.0 / math.sqrt(float(hidden_dim))
    # batched attention-style distance (single dot_general over the batch tile)
    s = jnp.einsum('bnh,bmh->bnm', q, k, preferred_element_type=f32) * inv_sqrt_h
    s = s - jnp.max(s, axis=-1, keepdims=True)
    # softmax row-normalizer cancels exactly against the degree normalizer below,
    # so normalize only once.  adj already holds (A + 1e-7) in the real block,
    # a unit diagonal on padded rows, and exact zeros on padded columns.
    p = jnp.exp(s) * adj
    deg = jnp.sum(p, axis=-1, keepdims=True)                           # > 0 everywhere
    pn = p * pl.reciprocal(deg, approx=True)                           # D^-1 A  (EUP recip)

    # off-diagonal mask (1 - I) used by MultiOrder
    row = lax.broadcasted_iota(jnp.int32, (n_pad, n_pad), 0)
    col = lax.broadcasted_iota(jnp.int32, (n_pad, n_pad), 1)
    offdiag = jnp.where(row == col, 0.0, 1.0)

    # MultiOrder: P^k * (1 - I), k = 1..k_s — each power stored directly into its
    # own lane-dense slice of the output block (no in-register concatenation).
    out_ref[0, 0] = (pn * offdiag).astype(out_ref.dtype)
    cur = pn
    for kk in range(1, k_s):                                           # k_s is small & static
        cur = jnp.einsum('bij,bjk->bik', cur, pn, preferred_element_type=f32)
        out_ref[0, kk] = (cur * offdiag).astype(out_ref.dtype)


# -----------------------------------------------------------------------------
# Wrapper: weight composition (glue), two pallas_calls, st_localization.
# -----------------------------------------------------------------------------
def dynamic_graph_constructor(history_data, node_embedding_d, node_embedding_u,
                              day_in_week_feat, month_in_year_feat, params,
                              *, k_s, k_t, graph_dtype=jnp.bfloat16):
    B, L, N, _ = history_data.shape
    H = params['W2'].shape[0]
    TE = day_in_week_feat.shape[-1]
    eps = 1e-5
    f32 = jnp.float32

    N_pad = _round_up(N, 128)          # lane-dense node dimension
    F = L + 2 * TE

    # ---- inputs: [x_ts | t_d | d_w] in the module's feature order -------------
    x_ts = jnp.transpose(history_data[..., 0], (0, 2, 1)).astype(f32)  # (B, N, L)
    t_d = day_in_week_feat[:, -1].astype(f32)                          # (B, N, TE)
    d_w = month_in_year_feat[:, -1].astype(f32)                        # (B, N, TE)
    xin = jnp.concatenate([x_ts, t_d, d_w], axis=-1)                   # (B, N, F)

    # ---- compose fc_ts_emb1 ∘ BN(eval) ∘ fc_ts_emb2 ∘ WQ_dyn / WK_dyn with the
    #      time-embedding slice of WQ/WK into single (F, H) projections ---------
    # TODO(synk): valid only for eval-mode BN/Dropout and no activation between
    # fc_ts_emb1 and fc_ts_emb2 (true for this module's reference); keep the
    # layers separate if a nonlinearity / training mode is introduced.
    scale = params['bn_gamma'] / jnp.sqrt(params['bn_var'] + eps)
    A = (params['W1'].T * scale[None, :]) @ params['W2'].T             # (L, H)
    c = (((params['b1'] - params['bn_mean']) * scale + params['bn_beta'])
         @ params['W2'].T + params['b2'])                              # (H,)

    WQ, WK = params['WQ'], params['WK']
    WQ_dyn, WQ_time, WQ_emb = WQ[:, :H], WQ[:, H:H + 2 * TE], WQ[:, H + 2 * TE:]
    WK_dyn, WK_time, WK_emb = WK[:, :H], WK[:, H:H + 2 * TE], WK[:, H + 2 * TE:]

    wq = jnp.concatenate([A @ WQ_dyn.T, WQ_time.T], axis=0).astype(f32)  # (F, H)
    wk = jnp.concatenate([A @ WK_dyn.T, WK_time.T], axis=0).astype(f32)  # (F, H)
    bq = (c @ WQ_dyn.T)[None, :].astype(f32)                             # (1, H)
    bk = (c @ WK_dyn.T)[None, :].astype(f32)                             # (1, H)

    # ---- per-modality node-embedding projections (tiny, computed once) --------
    emb = jnp.stack([node_embedding_d, node_embedding_u], 0).astype(f32)   # (2, N, nd)
    pad_n = ((0, 0), (0, N_pad - N), (0, 0))
    q_emb = jnp.pad(jnp.einsum('mnd,hd->mnh', emb, WQ_emb), pad_n).astype(f32)  # (2, Np, H)
    k_emb = jnp.pad(jnp.einsum('mnd,hd->mnh', emb, WK_emb), pad_n).astype(f32)

    # ---- padded adjacency: (A + 1e-7) in the real block, unit diagonal on padded
    #      rows (keeps D^-1 A finite there), exact zeros on padded columns -------
    adjs = params['adjs'].astype(f32)
    adj_pad = jnp.zeros((2, N_pad, N_pad), f32).at[:, :N, :N].set(adjs + 1e-7)
    if N_pad > N:
        pd = jnp.arange(N, N_pad)
        adj_pad = adj_pad.at[:, pd, pd].set(1.0)

    # ---- pass 1: shared Q / K projections, once for the whole batch -----------
    q_all, k_all = pl.pallas_call(
        functools.partial(_qk_project_kernel, n=N),
        out_shape=(jax.ShapeDtypeStruct((B, N_pad, H), f32),
                   jax.ShapeDtypeStruct((B, N_pad, H), f32)),
        grid=(B,),
        in_specs=[
            pl.BlockSpec((1, N, F), lambda b: (b, 0, 0)),
            pl.BlockSpec((F, H), lambda b: (0, 0)),
            pl.BlockSpec((1, H), lambda b: (0, 0)),
            pl.BlockSpec((F, H), lambda b: (0, 0)),
            pl.BlockSpec((1, H), lambda b: (0, 0)),
        ],
        out_specs=(pl.BlockSpec((1, N_pad, H), lambda b: (b, 0, 0)),
                   pl.BlockSpec((1, N_pad, H), lambda b: (b, 0, 0))),
        compiler_params=pltpu.CompilerParams(dimension_semantics=("parallel",)),
    )(xin, wq, bq, wk, bk)

    # ---- pass 2: dynamic graphs, grid = (modality, batch-tile) ----------------
    # size the batch tile against a conservative VMEM working-set budget
    per_b_bytes = (k_s + 3) * N_pad * N_pad * 4      # s, p/pn, cur + k_s output copies (f32)
    tb = max(1, min(B, (24 * 1024 * 1024) // per_b_bytes))
    while B % tb:                                    # keep tiles exact
        tb -= 1
    n_bt = B // tb

    out = pl.pallas_call(
        functools.partial(_dygraph_kernel, k_s=k_s, hidden_dim=H),
        out_shape=jax.ShapeDtypeStruct((2, k_s, B, N_pad, N_pad), graph_dtype),
        grid=(2, n_bt),
        in_specs=[
            pl.BlockSpec((tb, N_pad, H), lambda m, bt: (bt, 0, 0)),      # Q (shared)
            pl.BlockSpec((tb, N_pad, H), lambda m, bt: (bt, 0, 0)),      # K (shared)
            pl.BlockSpec((1, N_pad, H), lambda m, bt: (m, 0, 0)),        # Q emb (per modality)
            pl.BlockSpec((1, N_pad, H), lambda m, bt: (m, 0, 0)),        # K emb (per modality)
            pl.BlockSpec((1, N_pad, N_pad), lambda m, bt: (m, 0, 0)),    # adjacency (per mod.)
        ],
        out_specs=pl.BlockSpec((1, k_s, tb, N_pad, N_pad),
                               lambda m, bt: (m, 0, bt, 0, 0)),
        compiler_params=pltpu.CompilerParams(
            dimension_semantics=("parallel", "parallel"),
            vmem_limit_bytes=64 * 1024 * 1024),
    )(q_all, k_all, q_emb, k_emb, adj_pad)

    # ---- st_localization (module output layout) -------------------------------
    # TODO(synk): the k_t expansion is a pure repeat a fused consumer should keep
    # lazy; it is materialized here only to match the module's returned shapes.
    dynamic_graphs = []
    for m in range(2):
        for kk in range(k_s):
            g = out[m, kk, :, :N, :N].astype(jnp.float32)              # strip padding
            g = jnp.broadcast_to(g[:, :, None, :], (B, N, k_t, N)).reshape(B, N, k_t * N)
            dynamic_graphs.append(g)
    return dynamic_graphs


# -----------------------------------------------------------------------------
# Pure-JAX reference (mirrors the PyTorch module in eval mode) for verification.
# -----------------------------------------------------------------------------
def reference_forward(history_data, E_d, E_u, day_feat, month_feat, p, *, k_s, k_t):
    B, L, N, _ = history_data.shape
    H = p['W2'].shape[0]
    eps = 1e-5
    x = jnp.transpose(history_data[..., 0], (0, 2, 1)).reshape(B * N, L)
    h = x @ p['W1'].T + p['b1']
    h = (h - p['bn_mean']) / jnp.sqrt(p['bn_var'] + eps) * p['bn_gamma'] + p['bn_beta']
    dy = (h @ p['W2'].T + p['b2']).reshape(B, N, H)
    t_d = day_feat[:, -1]
    d_w = month_feat[:, -1]
    emb1 = jnp.broadcast_to(E_d[None], (B, N, E_d.shape[1]))
    emb2 = jnp.broadcast_to(E_u[None], (B, N, E_u.shape[1]))
    graphs = []
    for idx, Xf in enumerate([jnp.concatenate([dy, t_d, d_w, emb1], -1),
                              jnp.concatenate([dy, t_d, d_w, emb2], -1)]):
        Q = Xf @ p['WQ'].T
        K = Xf @ p['WK'].T
        S = jnp.einsum('bnh,bmh->bnm', Q, K) / math.sqrt(float(H))
        W = jax.nn.softmax(S, axis=-1)
        W = W * (p['adjs'][idx] + 1e-7)
        deg = jnp.sum(W, axis=2)
        inv = 1.0 / deg
        inv = jnp.where(jnp.isnan(inv) | jnp.isinf(inv), 0.0, inv)
        graphs.append(inv[:, :, None] * W)
    mask = 1.0 - jnp.eye(N)
    out = []
    for g in graphs:
        ordered = [g * mask]
        cur = g
        for _ in range(2, k_s + 1):
            cur = jnp.einsum('bij,bjk->bik', cur, g)
            ordered.append(cur * mask)
        for og in ordered:
            out.append(jnp.broadcast_to(og[:, :, None, :], (B, N, k_t, N)).reshape(B, N, k_t * N))
    return out


if __name__ == "__main__":
    # model_args: k_s=2, k_t=3, num_hidden=32, node_hidden=16, time_emb_dim=8, seq_length=8
    B, L, N, D_IN = 2, 8, 16, 3
    TE, NODE_DIM, HIDDEN, K_S, K_T = 8, 16, 32, 2, 3
    ALL_FEAT = HIDDEN + NODE_DIM + 2 * TE

    key = jax.random.PRNGKey(0)
    keys = jax.random.split(key, 12)

    history_data = jax.random.normal(keys[0], (B, L, N, D_IN), jnp.float32)
    E_d = jax.random.normal(keys[1], (N, NODE_DIM), jnp.float32) * 0.5
    E_u = jax.random.normal(keys[2], (N, NODE_DIM), jnp.float32) * 0.5
    day_in_week_feat = jax.random.normal(keys[3], (B, L, N, TE), jnp.float32)
    month_in_year_feat = jax.random.normal(keys[4], (B, L, N, TE), jnp.float32)

    params = dict(
        W1=jax.random.normal(keys[5], (2 * HIDDEN, L), jnp.float32) * 0.1,       # fc_ts_emb1
        b1=jax.random.normal(keys[6], (2 * HIDDEN,), jnp.float32) * 0.1,
        W2=jax.random.normal(keys[7], (HIDDEN, 2 * HIDDEN), jnp.float32) * 0.1,  # fc_ts_emb2
        b2=jax.random.normal(keys[8], (HIDDEN,), jnp.float32) * 0.1,
        WQ=jax.random.normal(keys[9], (HIDDEN, ALL_FEAT), jnp.float32) * 0.1,
        WK=jax.random.normal(keys[10], (HIDDEN, ALL_FEAT), jnp.float32) * 0.1,
        bn_gamma=jnp.ones((2 * HIDDEN,), jnp.float32),    # BatchNorm1d params /
        bn_beta=jnp.zeros((2 * HIDDEN,), jnp.float32),    # running stats (eval mode)
        bn_mean=jnp.zeros((2 * HIDDEN,), jnp.float32),
        bn_var=jnp.ones((2 * HIDDEN,), jnp.float32),
        adjs=jax.random.uniform(keys[11], (2, N, N), jnp.float32),    # predefined adjacencies
    )

    graphs = dynamic_graph_constructor(
        history_data, E_d, E_u, day_in_week_feat, month_in_year_feat, params,
        k_s=K_S, k_t=K_T)
    graphs = [jax.block_until_ready(g) for g in graphs]

    ref = reference_forward(history_data, E_d, E_u, day_in_week_feat,
                            month_in_year_feat, params, k_s=K_S, k_t=K_T)

    assert len(graphs) == 2 * K_S
    for gk, gr in zip(graphs, ref):
        assert gk.shape == (B, N, K_T * N)
        assert bool(jnp.all(jnp.isfinite(gk)))
        assert bool(jnp.allclose(gk, gr, rtol=2e-2, atol=2e-2))

    print("KERNEL_OK")
</pallas_src>

<mosaic_0001>
module attributes {stable_mosaic.version = 11 : i64} {
  func.func @_qk_project_kernel(%arg0: i32, %arg1: memref<1x16x24xf32, #tpu.memory_space<vmem>>, %arg2: memref<24x32xf32, #tpu.memory_space<vmem>>, %arg3: memref<1x32xf32, #tpu.memory_space<vmem>>, %arg4: memref<24x32xf32, #tpu.memory_space<vmem>>, %arg5: memref<1x32xf32, #tpu.memory_space<vmem>>, %arg6: memref<1x128x32xf32, #tpu.memory_space<vmem>>, %arg7: memref<1x128x32xf32, #tpu.memory_space<vmem>>) attributes {dimension_semantics = [#tpu.dimension_semantics<parallel>], iteration_bounds = array<i64: 2>, scalar_prefetch = 0 : i64, scratch_operands = 0 : i64, tpu.core_type = #tpu.core_type<tc>, window_params = [{transform_indices = @transform_0, window_bounds = array<i64: 1, 16, 24>}, {pipeline_mode = #tpu.pipeline_mode<synchronous>, transform_indices = @transform_1, window_bounds = array<i64: 24, 32>}, {pipeline_mode = #tpu.pipeline_mode<synchronous>, transform_indices = @transform_2, window_bounds = array<i64: 1, 32>}, {pipeline_mode = #tpu.pipeline_mode<synchronous>, transform_indices = @transform_3, window_bounds = array<i64: 24, 32>}, {pipeline_mode = #tpu.pipeline_mode<synchronous>, transform_indices = @transform_4, window_bounds = array<i64: 1, 32>}, {transform_indices = @transform_5, window_bounds = array<i64: 1, 128, 32>}, {transform_indices = @transform_6, window_bounds = array<i64: 1, 128, 32>}]} {
    %c0 = arith.constant 0 : index
    %c0_0 = arith.constant 0 : index
    %c0_1 = arith.constant 0 : index
    %0 = vector.load %arg1[%c0, %c0_0, %c0_1] : memref<1x16x24xf32, #tpu.memory_space<vmem>>, vector<1x16x24xf32>
    %1 = vector.shape_cast %0 : vector<1x16x24xf32> to vector<16x24xf32>
    %c0_2 = arith.constant 0 : index
    %c0_3 = arith.constant 0 : index
    %2 = vector.load %arg2[%c0_2, %c0_3] : memref<24x32xf32, #tpu.memory_space<vmem>>, vector<24x32xf32>
    %cst = arith.constant dense<0.000000e+00> : vector<16x32xf32>
    %3 = tpu.matmul %1, %2, %cst {dimension_numbers = #tpu.dot_dimension_numbers<[1], [0], [0], [1], [0, 0, 1, 1], [], []>} : vector<16x24xf32>, vector<24x32xf32>, vector<16x32xf32> -> vector<16x32xf32>
    %c0_4 = arith.constant 0 : index
    %c0_5 = arith.constant 0 : index
    %4 = vector.load %arg3[%c0_4, %c0_5] : memref<1x32xf32, #tpu.memory_space<vmem>>, vector<1x32xf32>
    %5 = vector.broadcast %4 : vector<1x32xf32> to vector<16x32xf32>
    %6 = arith.addf %3, %5 : vector<16x32xf32>
    %c0_6 = arith.constant 0 : index
    %c0_7 = arith.constant 0 : index
    %7 = vector.load %arg4[%c0_6, %c0_7] : memref<24x32xf32, #tpu.memory_space<vmem>>, vector<24x32xf32>
    %cst_8 = arith.constant dense<0.000000e+00> : vector<16x32xf32>
    %8 = tpu.matmul %1, %7, %cst_8 {dimension_numbers = #tpu.dot_dimension_numbers<[1], [0], [0], [1], [0, 0, 1, 1], [], []>} : vector<16x24xf32>, vector<24x32xf32>, vector<16x32xf32> -> vector<16x32xf32>
    %c0_9 = arith.constant 0 : index
    %c0_10 = arith.constant 0 : index
    %9 = vector.load %arg5[%c0_9, %c0_10] : memref<1x32xf32, #tpu.memory_space<vmem>>, vector<1x32xf32>
    %10 = vector.broadcast %9 : vector<1x32xf32> to vector<16x32xf32>
    %11 = arith.addf %8, %10 : vector<16x32xf32>
    %cst_11 = arith.constant 0.000000e+00 : f32
    %12 = vector.broadcast %cst_11 : f32 to vector<112x32xf32>
    %c0_12 = arith.constant 0 : index
    %c16 = arith.constant 16 : index
    %c0_13 = arith.constant 0 : index
    %13 = vector.load %arg6[%c0_12, %c16, %c0_13] : memref<1x128x32xf32, #tpu.memory_space<vmem>>, vector<1x112x32xf32>
    %14 = vector.shape_cast %13 : vector<1x112x32xf32> to vector<112x32xf32>
    %15 = vector.shape_cast %12 : vector<112x32xf32> to vector<1x112x32xf32>
    tpu.vector_store %arg6[%c0_12, %c16, %c0_13], %15 {strides = array<i32>} : memref<1x128x32xf32, #tpu.memory_space<vmem>>, vector<1x112x32xf32>,
    %c0_14 = arith.constant 0 : index
    %c16_15 = arith.constant 16 : index
    %c0_16 = arith.constant 0 : index
    %16 = vector.load %arg7[%c0_14, %c16_15, %c0_16] : memref<1x128x32xf32, #tpu.memory_space<vmem>>, vector<1x112x32xf32>
    %17 = vector.shape_cast %16 : vector<1x112x32xf32> to vector<112x32xf32>
    %18 = vector.shape_cast %12 : vector<112x32xf32> to vector<1x112x32xf32>
    tpu.vector_store %arg7[%c0_14, %c16_15, %c0_16], %18 {strides = array<i32>} : memref<1x128x32xf32, #tpu.memory_space<vmem>>, vector<1x112x32xf32>,
    %c0_17 = arith.constant 0 : index
    %c0_18 = arith.constant 0 : index
    %c0_19 = arith.constant 0 : index
    %19 = vector.load %arg6[%c0_17, %c0_18, %c0_19] : memref<1x128x32xf32, #tpu.memory_space<vmem>>, vector<1x16x32xf32>
    %20 = vector.shape_cast %19 : vector<1x16x32xf32> to vector<16x32xf32>
    %21 = vector.shape_cast %6 : vector<16x32xf32> to vector<1x16x32xf32>
    tpu.vector_store %arg6[%c0_17, %c0_18, %c0_19], %21 {strides = array<i32>} : memref<1x128x32xf32, #tpu.memory_space<vmem>>, vector<1x16x32xf32>,
    %c0_20 = arith.constant 0 : index
    %c0_21 = arith.constant 0 : index
    %c0_22 = arith.constant 0 : index
    %22 = vector.load %arg7[%c0_20, %c0_21, %c0_22] : memref<1x128x32xf32, #tpu.memory_space<vmem>>, vector<1x16x32xf32>
    %23 = vector.shape_cast %22 : vector<1x16x32xf32> to vector<16x32xf32>
    %24 = vector.shape_cast %11 : vector<16x32xf32> to vector<1x16x32xf32>
    tpu.vector_store %arg7[%c0_20, %c0_21, %c0_22], %24 {strides = array<i32>} : memref<1x128x32xf32, #tpu.memory_space<vmem>>, vector<1x16x32xf32>,
    return
  }
  func.func @transform_0(%arg0: i32) -> (i32, i32, i32) {
    %c0_i32 = arith.constant 0 : i32
    %c0_i32_0 = arith.constant 0 : i32
    %c0_i32_1 = arith.constant 0 : i32
    return %arg0, %c0_i32, %c0_i32_0 : i32, i32, i32
  }
  func.func @transform_1(%arg0: i32) -> (i32, i32) {
    %c0_i32 = arith.constant 0 : i32
    %c0_i32_0 = arith.constant 0 : i32
    %c0_i32_1 = arith.constant 0 : i32
    return %c0_i32, %c0_i32_0 : i32, i32
  }
  func.func @transform_2(%arg0: i32) -> (i32, i32) {
    %c0_i32 = arith.constant 0 : i32
    %c0_i32_0 = arith.constant 0 : i32
    %c0_i32_1 = arith.constant 0 : i32
    return %c0_i32, %c0_i32_0 : i32, i32
  }
  func.func @transform_3(%arg0: i32) -> (i32, i32) {
    %c0_i32 = arith.constant 0 : i32
    %c0_i32_0 = arith.constant 0 : i32
    %c0_i32_1 = arith.constant 0 : i32
    return %c0_i32, %c0_i32_0 : i32, i32
  }
  func.func @transform_4(%arg0: i32) -> (i32, i32) {
    %c0_i32 = arith.constant 0 : i32
    %c0_i32_0 = arith.constant 0 : i32
    %c0_i32_1 = arith.constant 0 : i32
    return %c0_i32, %c0_i32_0 : i32, i32
  }
  func.func @transform_5(%arg0: i32) -> (i32, i32, i32) {
    %c0_i32 = arith.constant 0 : i32
    %c0_i32_0 = arith.constant 0 : i32
    %c0_i32_1 = arith.constant 0 : i32
    return %arg0, %c0_i32, %c0_i32_0 : i32, i32, i32
  }
  func.func @transform_6(%arg0: i32) -> (i32, i32, i32) {
    %c0_i32 = arith.constant 0 : i32
    %c0_i32_0 = arith.constant 0 : i32
    %c0_i32_1 = arith.constant 0 : i32
    return %arg0, %c0_i32, %c0_i32_0 : i32, i32, i32
  }
}

</mosaic_0001>

<llo_original>
// kernel: tpu_custom_call.1
$region0: #{tpu_custom_call.1}
  #allocation0 [shape = 'u32[]', space=smem, size = 0x4, offset = 0x4, fixed_abs, tag = 'smem constant byte address 0x4 - core index']
  #allocation1 [shape = 'u32[144,128]{1,0:T(1,128)}', space=vmem, size = 0x12000, scoped, tag = 'internal scratch']
  %s0 = inlined_call_operand.hbm [shape: f32[2,16,24], index: 0, kind: input, shape index: {}]
  %s1 = inlined_call_operand.hbm [shape: f32[24,32], index: 1, kind: input, shape index: {}]
  %s2 = inlined_call_operand.vmem [shape: f32[1,32], index: 2, kind: input, shape index: {}]
  %s3 = inlined_call_operand.hbm [shape: f32[24,32], index: 3, kind: input, shape index: {}]
  %s4 = inlined_call_operand.vmem [shape: f32[1,32], index: 4, kind: input, shape index: {}]
  %s5 = inlined_call_operand.vmem [shape: f32[2,128,32], index: 5, kind: output, shape index: {0}]
  %s6 = inlined_call_operand.vmem [shape: f32[2,128,32], index: 6, kind: output, shape index: {1}]
  %7 = xla_tuple %s5, %s6
  %s8 = sld [smem:[#allocation0]]
  $region73: #{tpu_custom_call.1} parent=0
    _
  %s10 = ssub.s32 1, %s8
  %s11 = scalar_select 0, %s10, %s8
  $region1: #{tpu_custom_call.1} parent=0
    #allocation2 [shape = 'u8[16384]{0}', space=vmem, size = 0x4000, scoped, tag = 'input window, operand 0']
    #allocation3 [shape = 's32[2]{0}', space=sflag, size = 0x8, scoped, tag = 'scoped memory for tpu_custom_call.1']
    #allocation4 [shape = 'u8[12288]{0}', space=vmem, size = 0x3000, scoped, tag = 'input window, operand 1, single buffered']
    #allocation5 [shape = 's32[1]{0}', space=sflag, size = 0x4, scoped, tag = 'scoped memory for tpu_custom_call.1']
    #allocation6 [shape = 'u8[12288]{0}', space=vmem, size = 0x3000, scoped, tag = 'input window, operand 3, single buffered']
    %12 = vsyncpa [#allocation3], 0
    %s13 = scalar_lea.sflag [#allocation3], 1
    %14 = vsyncpa %s13, 0
    %15 = vsyncpa [#allocation5], 0
    loop: start=0, step=1, limit=4
    $region2: #{tpu_custom_call.1} parent=1 // loop_pre_header
      _
    $region3: #{tpu_custom_call.1} parent=1 // loop_header
      %s17 = sphi 0, %s21
      %p18 = scmp.ge.s32.totalorder %s17, 4
      %s27 = sphi 0, %s29
      %s30 = sphi 0, %s27
      %s31 = sphi 0, %s30
      %s47 = sphi 0, %s31
      %s51 = sphi 0, %s51
      %s53 = sphi 0, %s51
      %s54 = sphi 0, %s53
      %s68 = sphi 0, %s54
      %s72 = sphi 0, %s72
      %s74 = sphi 0, %s72
      %s75 = sphi 0, %s74
      %s89 = sphi 0, %s75
      %s93 = sphi 0, %s93
      %s95 = sphi 0, %s93
      %s96 = sphi 0, %s95
      %s110 = sphi 0, %s96
      %s114 = sphi 0, %s114
      %s116 = sphi 0, %s114
      %s117 = sphi 0, %s116
      %s131 = sphi 0, %s117
      %s137 = sphi 0, %s139
      %s140 = sphi 0, %s137
      %s141 = sphi 0, %s140
      %s157 = sphi 0, %s141
      %s163 = sphi 0, %s165
      %s166 = sphi 0, %s163
      %s167 = sphi 0, %s166
      %s183 = sphi 0, %s167
    $region4: #{tpu_custom_call.1} parent=1 // loop_header_branch
      %20 = sbr.rel (%p18) target = $region8
    $region5: #{tpu_custom_call.1} parent=1 // loop_body
      %s22 = ssub.s32 %s17, 1
      %s23 = ssub.s32 %s17, 2
      %s24 = sadd.s32 %s17, 1
      %s25 = ssub.s32 %s17, %s24
      %p26 = scmp.eq.s32.totalorder %s25, 0
      %s28 = sadd.s32 %s27, 1
      %s29 = scalar_select %p26, %s27, %s28
      %p32 = pneg %p26
      %p33 = scmp.eq.s32.totalorder %s17, 1
      %p34 = por %p32, %p33
      %p35 = scmp.ne.s32.totalorder %s27, %s30
      %p36 = scmp.eq.s32.totalorder %s17, 0
      %p37 = por %p35, %p36
      %p38 = scmp.ne.s32.totalorder %s27, %s30
      %p39 = scmp.eq.s32.totalorder %s22, 1
      %p40 = por %p38, %p39
      %p41 = scmp.ne.s32.totalorder %s30, %s31
      %p42 = scmp.eq.s32.totalorder %s22, 0
      %p43 = por %p41, %p42
      %p44 = scmp.ne.s32.totalorder %s30, %s31
      %p45 = scmp.eq.s32.totalorder %s23, 1
      %p46 = por %p44, %p45
      %p48 = scmp.ne.s32.totalorder %s31, %s47
      %p49 = scmp.eq.s32.totalorder %s23, 0
      %p50 = por %p48, %p49
      %s52 = sadd.s32 %s51, 1
      %p55 = scmp.eq.s32.totalorder %s17, 1
      %p56 = scmp.ne.s32.totalorder %s51, %s53
      %p57 = scmp.eq.s32.totalorder %s17, 0
      %p58 = por %p56, %p57
      %p59 = scmp.ne.s32.totalorder %s51, %s53
      %p60 = scmp.eq.s32.totalorder %s22, 1
      %p61 = por %p59, %p60
      %p62 = scmp.ne.s32.totalorder %s53, %s54
      %p63 = scmp.eq.s32.totalorder %s22, 0
      %p64 = por %p62, %p63
      %p65 = scmp.ne.s32.totalorder %s53, %s54
      %p66 = scmp.eq.s32.totalorder %s23, 1
      %p67 = por %p65, %p66
      %p69 = scmp.ne.s32.totalorder %s54, %s68
      %p70 = scmp.eq.s32.totalorder %s23, 0
      %p71 = por %p69, %p70
      %s73 = sadd.s32 %s72, 1
      %p76 = scmp.eq.s32.totalorder %s17, 1
      %p77 = scmp.ne.s32.totalorder %s72, %s74
      %p78 = scmp.eq.s32.totalorder %s17, 0
      %p79 = por %p77, %p78
      %p80 = scmp.ne.s32.totalorder %s72, %s74
      %p81 = scmp.eq.s32.totalorder %s22, 1
      %p82 = por %p80, %p81
      %p83 = scmp.ne.s32.totalorder %s74, %s75
      %p84 = scmp.eq.s32.totalorder %s22, 0
      %p85 = por %p83, %p84
      %p86 = scmp.ne.s32.totalorder %s74, %s75
      %p87 = scmp.eq.s32.totalorder %s23, 1
      %p88 = por %p86, %p87
      %p90 = scmp.ne.s32.totalorder %s75, %s89
      %p91 = scmp.eq.s32.totalorder %s23, 0
      %p92 = por %p90, %p91
      %s94 = sadd.s32 %s93, 1
      %p97 = scmp.eq.s32.totalorder %s17, 1
      %p98 = scmp.ne.s32.totalorder %s93, %s95
      %p99 = scmp.eq.s32.totalorder %s17, 0
      %p100 = por %p98, %p99
      %p101 = scmp.ne.s32.totalorder %s93, %s95
      %p102 = scmp.eq.s32.totalorder %s22, 1
      %p103 = por %p101, %p102
      %p104 = scmp.ne.s32.totalorder %s95, %s96
      %p105 = scmp.eq.s32.totalorder %s22, 0
      %p106 = por %p104, %p105
      %p107 = scmp.ne.s32.totalorder %s95, %s96
      %p108 = scmp.eq.s32.totalorder %s23, 1
      %p109 = por %p107, %p108
      %p111 = scmp.ne.s32.totalorder %s96, %s110
      %p112 = scmp.eq.s32.totalorder %s23, 0
      %p113 = por %p111, %p112
      %s115 = sadd.s32 %s114, 1
      %p118 = scmp.eq.s32.totalorder %s17, 1
      %p119 = scmp.ne.s32.totalorder %s114, %s116
      %p120 = scmp.eq.s32.totalorder %s17, 0
      %p121 = por %p119, %p120
      %p122 = scmp.ne.s32.totalorder %s114, %s116
      %p123 = scmp.eq.s32.totalorder %s22, 1
      %p124 = por %p122, %p123
      %p125 = scmp.ne.s32.totalorder %s116, %s117
      %p126 = scmp.eq.s32.totalorder %s22, 0
      %p127 = por %p125, %p126
      %p128 = scmp.ne.s32.totalorder %s116, %s117
      %p129 = scmp.eq.s32.totalorder %s23, 1
      %p130 = por %p128, %p129
      %p132 = scmp.ne.s32.totalorder %s117, %s131
      %p133 = scmp.eq.s32.totalorder %s23, 0
      %p134 = por %p132, %p133
      %s135 = ssub.s32 %s17, %s24
      %p136 = scmp.eq.s32.totalorder %s135, 0
      %s138 = sadd.s32 %s137, 1
      %s139 = scalar_select %p136, %s137, %s138
      %p142 = pneg %p136
      %p143 = scmp.eq.s32.totalorder %s17, 1
      %p144 = por %p142, %p143
      %p145 = scmp.ne.s32.totalorder %s137, %s140
      %p146 = scmp.eq.s32.totalorder %s17, 0
      %p147 = por %p145, %p146
      %p148 = scmp.ne.s32.totalorder %s137, %s140
      %p149 = scmp.eq.s32.totalorder %s22, 1
      %p150 = por %p148, %p149
      %p151 = scmp.ne.s32.totalorder %s140, %s141
      %p152 = scmp.eq.s32.totalorder %s22, 0
      %p153 = por %p151, %p152
      %p154 = scmp.ne.s32.totalorder %s140, %s141
      %p155 = scmp.eq.s32.totalorder %s23, 1
      %p156 = por %p154, %p155
      %p158 = scmp.ne.s32.totalorder %s141, %s157
      %p159 = scmp.eq.s32.totalorder %s23, 0
      %p160 = por %p158, %p159
      %s161 = ssub.s32 %s17, %s24
      %p162 = scmp.eq.s32.totalorder %s161, 0
      %s164 = sadd.s32 %s163, 1
      %s165 = scalar_select %p162, %s163, %s164
      %p168 = pneg %p162
      %p169 = scmp.eq.s32.totalorder %s17, 1
      %p170 = por %p168, %p169
      %p171 = scmp.ne.s32.totalorder %s163, %s166
      %p172 = scmp.eq.s32.totalorder %s17, 0
      %p173 = por %p171, %p172
      %p174 = scmp.ne.s32.totalorder %s163, %s166
      %p175 = scmp.eq.s32.totalorder %s22, 1
      %p176 = por %p174, %p175
      %p177 = scmp.ne.s32.totalorder %s166, %s167
      %p178 = scmp.eq.s32.totalorder %s22, 0
      %p179 = por %p177, %p178
      %p180 = scmp.ne.s32.totalorder %s166, %s167
      %p181 = scmp.eq.s32.totalorder %s23, 1
      %p182 = por %p180, %p181
      %p184 = scmp.ne.s32.totalorder %s167, %s183
      %p185 = scmp.eq.s32.totalorder %s23, 0
      %p186 = por %p184, %p185
      %p187 = scmp.le.s32.totalorder 1, %s17
      %p188 = scmp.lt.s32.totalorder %s17, 3
      %p189 = pnand %p187, %p188
      %p190 = pneg %p189
      // Predicated region
      $region9: #{tpu_custom_call.1} parent=5 // pred_check
        _
      $region10: #{tpu_custom_call.1} parent=5 // pred_check_branch
        %192 = sbr.rel (%p189) target = $region12
      $region11: #{tpu_custom_call.1} parent=5 // pred_region
        %s193 = ssub.s32 %s17, 1
        // Predicated region
        $region13: #{tpu_custom_call.1} parent=11 // pred_check
          %p194 = pneg %p64
        $region14: #{tpu_custom_call.1} parent=11 // pred_check_branch
          %196 = sbr.rel (%p194) target = $region16
        $region15: #{tpu_custom_call.1} parent=11 // pred_region
          %s198 = ssub.s32 384, 384
          %199 = vsyncadd [#allocation5], %s198
          %s200 = sshll.u32 [#allocation4], 4
          %s201 = int_to_ptr.vmem [resolvable:$true] %s200
          %206 = dma.hbm_to_vmem [thread:$0]  %s1, 384, %s201, [#allocation5], 128, 128, 8
        $region16: #{tpu_custom_call.1} parent=11 // pred_fallthru
          _
        // Predicated region
        $region17: #{tpu_custom_call.1} parent=11 // pred_check
          %p207 = pneg %p85
        $region18: #{tpu_custom_call.1} parent=11 // pred_check_branch
          %209 = sbr.rel (%p207) target = $region20
        $region19: #{tpu_custom_call.1} parent=11 // pred_region
          _
        $region20: #{tpu_custom_call.1} parent=11 // pred_fallthru
          _
        // Predicated region
        $region21: #{tpu_custom_call.1} parent=11 // pred_check
          %p210 = pneg %p106
        $region22: #{tpu_custom_call.1} parent=11 // pred_check_branch
          %212 = sbr.rel (%p210) target = $region24
        $region23: #{tpu_custom_call.1} parent=11 // pred_region
          %s214 = ssub.s32 384, 384
          %215 = vsyncadd [#allocation5], %s214
          %s216 = sshll.u32 [#allocation6], 4
          %s217 = int_to_ptr.vmem [resolvable:$true] %s216
          %222 = dma.hbm_to_vmem [thread:$0]  %s3, 384, %s217, [#allocation5], 128, 128, 8
        $region24: #{tpu_custom_call.1} parent=11 // pred_fallthru
          _
        // Predicated region
        $region25: #{tpu_custom_call.1} parent=11 // pred_check
          %p223 = pneg %p127
        $region26: #{tpu_custom_call.1} parent=11 // pred_check_branch
          %225 = sbr.rel (%p223) target = $region28
        $region27: #{tpu_custom_call.1} parent=11 // pred_region
          _
        $region28: #{tpu_custom_call.1} parent=11 // pred_fallthru
          _
      $region12: #{tpu_custom_call.1} parent=5 // pred_fallthru
        _
      %p226 = scmp.lt.s32.totalorder %s17, 2
      // Predicated region
      $region29: #{tpu_custom_call.1} parent=5 // pred_check
        %p227 = pneg %p226
      $region30: #{tpu_custom_call.1} parent=5 // pred_check_branch
        %229 = sbr.rel (%p227) target = $region32
      $region31: #{tpu_custom_call.1} parent=5 // pred_region
        // Predicated region
        $region33: #{tpu_custom_call.1} parent=31 // pred_check
          %p230 = pneg %p37
        $region34: #{tpu_custom_call.1} parent=31 // pred_check_branch
          %232 = sbr.rel (%p230) target = $region36
        $region35: #{tpu_custom_call.1} parent=31 // pred_region
          %s233 = sand.u32 %s27, 1
          %s234 = scalar_lea.sflag [#allocation3], %s233
          %s235 = sand.u32 %s27, 1
          %s236 = smul.addr %s235, 16
          %s237 = scalar_lea.vmem [#allocation2], %s236
          %s239 = ssub.s32 256, 256
          %240 = vsyncadd %s234, %s239
          %s241 = smul.addr %s17, 2
          %s242 = smul.addr %s241, 128
          %s243 = scalar_lea.hbm %s0, %s242
          %s244 = sshll.u32 %s237, 4
          %s245 = int_to_ptr.vmem [resolvable:$true] %s244
          %250 = dma.hbm_to_vmem [thread:$0]  %s243, 256, %s245, %s234, 128, 128, 8
        $region36: #{tpu_custom_call.1} parent=31 // pred_fallthru
          _
      $region32: #{tpu_custom_call.1} parent=5 // pred_fallthru
        _
      %p251 = scmp.le.s32.totalorder 1, %s17
      %p252 = scmp.lt.s32.totalorder %s17, 3
      %p253 = pnand %p251, %p252
      %p254 = pneg %p253
      // Predicated region
      $region37: #{tpu_custom_call.1} parent=5 // pred_check
        _
      $region38: #{tpu_custom_call.1} parent=5 // pred_check_branch
        %256 = sbr.rel (%p253) target = $region40
      $region39: #{tpu_custom_call.1} parent=5 // pred_region
        %s257 = ssub.s32 %s17, 1
        %s258 = sand.u32 %s30, 1
        %s259 = scalar_lea.sflag [#allocation3], %s258
        %s260 = sand.u32 %s30, 1
        %s261 = smul.addr %s260, 16
        %s262 = scalar_lea.vmem [#allocation2], %s261
        // Predicated region
        $region41: #{tpu_custom_call.1} parent=39 // pred_check
          %p263 = pneg %p43
        $region42: #{tpu_custom_call.1} parent=39 // pred_check_branch
          %265 = sbr.rel (%p263) target = $region44
        $region43: #{tpu_custom_call.1} parent=39 // pred_region
          %266 = dma.done %s259, 256
        $region44: #{tpu_custom_call.1} parent=39 // pred_fallthru
          _
        // Predicated region
        $region45: #{tpu_custom_call.1} parent=39 // pred_check
          %p267 = pneg %p64
        $region46: #{tpu_custom_call.1} parent=39 // pred_check_branch
          %269 = sbr.rel (%p267) target = $region48
        $region47: #{tpu_custom_call.1} parent=39 // pred_region
          %270 = dma.done [#allocation5], 384
        $region48: #{tpu_custom_call.1} parent=39 // pred_fallthru
          _
        // Predicated region
        $region49: #{tpu_custom_call.1} parent=39 // pred_check
          %p271 = pneg %p106
        $region50: #{tpu_custom_call.1} parent=39 // pred_check_branch
          %273 = sbr.rel (%p271) target = $region52
        $region51: #{tpu_custom_call.1} parent=39 // pred_region
          %274 = dma.done [#allocation5], 384
        $region52: #{tpu_custom_call.1} parent=39 // pred_fallthru
          _
        %s275 = sand.u32 %s30, 1
        %s276 = scalar_lea.sflag [#allocation3], %s275
        %s277 = sand.u32 %s30, 1
        %s278 = smul.addr %s277, 16
        %s279 = scalar_lea.vmem [#allocation2], %s278
        %p280 = pneg %p43
        %p281 = pneg %p40
        %p282 = pneg %p64
        %p283 = pneg %p61
        %p284 = pneg %p85
        %p285 = pneg %p82
        %p286 = pneg %p106
        %p287 = pneg %p103
        %p288 = pneg %p127
        %p289 = pneg %p124
        %p290 = pneg %p153
        %p291 = pneg %p150
        %p292 = scmp.lt.s32.totalorder %s22, 1
        %s293 = scalar_select %p292, %s22, 1
        %s294 = smul.addr %s293, 16
        %s295 = smul.addr %s294, 8
        %s296 = scalar_lea.vmem %s5, %s295
        %p297 = pneg %p179
        %p298 = pneg %p176
        %p299 = scmp.lt.s32.totalorder %s22, 1
        %s300 = scalar_select %p299, %s22, 1
        %s301 = smul.addr %s300, 16
        %s302 = smul.addr %s301, 8
        %s303 = scalar_lea.vmem %s6, %s302
        %p304 = scmp.lt.s32.totalorder %s22, 1
        %s305 = scalar_select %p304, %s22, 1
        %s306 = smul.addr %s305, 16
        %s307 = smul.addr %s306, 8
        %s308 = scalar_lea.vmem %s5, %s307
        %p309 = scmp.lt.s32.totalorder %s22, 1
        %s310 = scalar_select %p309, %s22, 1
        %s311 = smul.addr %s310, 16
        %s312 = smul.addr %s311, 8
        %s313 = scalar_lea.vmem %s6, %s312
        %v314 = vld [vmem:[%s262] sm:$0xff]
        %v315 = vld [vmem:[%s262 + $0x8] sm:$0xff]
        %v316 = vld [vmem:[#allocation4] sm:$0xff]
        %v317 = vld [vmem:[#allocation4 + $0x8] sm:$0xff]
        %v318 = vld [vmem:[#allocation4 + $0x10] sm:$0xff]
        %v319 = vld [vmem:[%s2] sm:$0x1]
        %v321 = vlaneseq
        %v322 = vshrl.u32 %v321, 7
        %v323 = vsub.s32 0, %v322
        %v324 = vrot.slane %v319, %v323
        %vm326 = vcmask 195584
        %v328 = vsel %vm326, %v314, 0
        %v331 = vsel %vm326, %v315, 0
        %333 = vmatprep.subr.mxu0 0.0
        %334 = vmatpush1.msra.mxu0 0.0
        %335 = vmatprep.subr.mxu0 0.0
        %336 = vmatpush1.msra.mxu0 0.0
        %337 = vmatprep.subr.mxu0 0.0
        %338 = vmatpush1.msra.mxu0 0.0
        %339 = vmatprep.subr.mxu0 0.0
        %340 = vmatpush1.msra.mxu0 0.0
        %341 = vmatprep.subr.mxu0 0.0
        %342 = vmatpush1.msra.mxu0 0.0
        %343 = vmatprep.subr.mxu0 0.0
        %344 = vmatpush1.msra.mxu0 0.0
        %345 = vmatprep.subr.mxu0 0.0
        %346 = vmatpush1.msra.mxu0 0.0
        %347 = vmatprep.subr.mxu0 0.0
        %348 = vmatpush1.msra.mxu0 0.0
        %349 = vmatprep.subr.mxu0 0.0
        %350 = vmatpush1.msra.mxu0 0.0
        %351 = vmatprep.subr.mxu0 0.0
        %352 = vmatpush1.msra.mxu0 0.0
        %353 = vmatprep.subr.mxu0 0.0
        %354 = vmatpush1.msra.mxu0 0.0
        %355 = vmatprep.subr.mxu0 0.0
        %356 = vmatpush1.msra.mxu0 0.0
        %357 = vmatprep.subr.mxu0 0.0
        %358 = vmatpush1.msra.mxu0 0.0
        %359 = vmatprep.subr.mxu0 0.0
        %360 = vmatpush1.msra.mxu0 %v318
        %361 = vmatprep.subr.mxu0 0.0
        %362 = vmatpush1.msra.mxu0 %v317
        %363 = vmatprep.subr.mxu0 0.0
        %364 = vmatpush1.msra.mxu0 %v316
        %365 = vmatprep.subr.mxu0 0.0
        %366 = vmatpush2.msra.mxu0 0.0
        %367 = vmatprep.subr.mxu0 0.0
        %368 = vmatpush2.msra.mxu0 0.0
        %369 = vmatprep.subr.mxu0 0.0
        %370 = vmatpush2.msra.mxu0 0.0
        %371 = vmatprep.subr.mxu0 0.0
        %372 = vmatpush2.msra.mxu0 0.0
        %373 = vmatprep.subr.mxu0 0.0
        %374 = vmatpush2.msra.mxu0 0.0
        %375 = vmatprep.subr.mxu0 0.0
        %376 = vmatpush2.msra.mxu0 0.0
        %377 = vmatprep.subr.mxu0 0.0
        %378 = vmatpush2.msra.mxu0 0.0
        %379 = vmatprep.subr.mxu0 0.0
        %380 = vmatpush2.msra.mxu0 0.0
        %381 = vmatprep.subr.mxu0 0.0
        %382 = vmatpush2.msra.mxu0 0.0
        %383 = vmatprep.subr.mxu0 0.0
        %384 = vmatpush2.msra.mxu0 0.0
        %385 = vmatprep.subr.mxu0 0.0
        %386 = vmatpush2.msra.mxu0 0.0
        %387 = vmatprep.subr.mxu0 0.0
        %388 = vmatpush2.msra.mxu0 0.0
        %389 = vmatprep.subr.mxu0 0.0
        %390 = vmatpush2.msra.mxu0 0.0
        %391 = vmatprep.subr.mxu0 0.0
        %392 = vmatpush2.msra.mxu0 0.0
        %393 = vmatprep.subr.mxu0 0.0
        %394 = vmatpush2.msra.mxu0 0.0
        %395 = vmatprep.subr.mxu0 0.0
        %396 = vmatpush2.msra.mxu0 0.0
        %397 = vmatprep.mubr.f32.mxu0 0.0
        %398 = vmatmul.mubr.f32.gmra.mxu0 %v328
        %v399 = vpop.f32.mrf.mxu0
        %v400 = vadd.f32 %v324, %v399
        %v401 = vpop.f32.mrf.mxu0
        %402 = vmatprep.mubr.f32.mxu0 0.0
        %403 = vmatmul.mubr.f32.gmra.mxu0 %v331
        %v404 = vpop.f32.mrf.mxu0
        %v405 = vadd.f32 %v324, %v404
        %v406 = vpop.f32.mrf.mxu0
        %407 = vdwg.mxu0
        %v408 = vld [vmem:[#allocation6] sm:$0xff]
        %v409 = vld [vmem:[#allocation6 + $0x8] sm:$0xff]
        %v410 = vld [vmem:[#allocation6 + $0x10] sm:$0xff]
        %v411 = vld [vmem:[%s4] sm:$0x1]
        %v413 = vlaneseq
        %v414 = vshrl.u32 %v413, 7
        %v415 = vsub.s32 0, %v414
        %v416 = vrot.slane %v411, %v415
        %418 = vmatprep.subr.mxu0 0.0
        %419 = vmatpush1.msra.mxu0 0.0
        %420 = vmatprep.subr.mxu0 0.0
        %421 = vmatpush1.msra.mxu0 0.0
        %422 = vmatprep.subr.mxu0 0.0
        %423 = vmatpush1.msra.mxu0 0.0
        %424 = vmatprep.subr.mxu0 0.0
        %425 = vmatpush1.msra.mxu0 0.0
        %426 = vmatprep.subr.mxu0 0.0
        %427 = vmatpush1.msra.mxu0 0.0
        %428 = vmatprep.subr.mxu0 0.0
        %429 = vmatpush1.msra.mxu0 0.0
        %430 = vmatprep.subr.mxu0 0.0
        %431 = vmatpush1.msra.mxu0 0.0
        %432 = vmatprep.subr.mxu0 0.0
        %433 = vmatpush1.msra.mxu0 0.0
        %434 = vmatprep.subr.mxu0 0.0
        %435 = vmatpush1.msra.mxu0 0.0
        %436 = vmatprep.subr.mxu0 0.0
        %437 = vmatpush1.msra.mxu0 0.0
        %438 = vmatprep.subr.mxu0 0.0
        %439 = vmatpush1.msra.mxu0 0.0
        %440 = vmatprep.subr.mxu0 0.0
        %441 = vmatpush1.msra.mxu0 0.0
        %442 = vmatprep.subr.mxu0 0.0
        %443 = vmatpush1.msra.mxu0 0.0
        %444 = vmatprep.subr.mxu0 0.0
        %445 = vmatpush1.msra.mxu0 %v410
        %446 = vmatprep.subr.mxu0 0.0
        %447 = vmatpush1.msra.mxu0 %v409
        %448 = vmatprep.subr.mxu0 0.0
        %449 = vmatpush1.msra.mxu0 %v408
        %450 = vmatprep.subr.mxu0 0.0
        %451 = vmatpush2.msra.mxu0 0.0
        %452 = vmatprep.subr.mxu0 0.0
        %453 = vmatpush2.msra.mxu0 0.0
        %454 = vmatprep.subr.mxu0 0.0
        %455 = vmatpush2.msra.mxu0 0.0
        %456 = vmatprep.subr.mxu0 0.0
        %457 = vmatpush2.msra.mxu0 0.0
        %458 = vmatprep.subr.mxu0 0.0
        %459 = vmatpush2.msra.mxu0 0.0
        %460 = vmatprep.subr.mxu0 0.0
        %461 = vmatpush2.msra.mxu0 0.0
        %462 = vmatprep.subr.mxu0 0.0
        %463 = vmatpush2.msra.mxu0 0.0
        %464 = vmatprep.subr.mxu0 0.0
        %465 = vmatpush2.msra.mxu0 0.0
        %466 = vmatprep.subr.mxu0 0.0
        %467 = vmatpush2.msra.mxu0 0.0
        %468 = vmatprep.subr.mxu0 0.0
        %469 = vmatpush2.msra.mxu0 0.0
        %470 = vmatprep.subr.mxu0 0.0
        %471 = vmatpush2.msra.mxu0 0.0
        %472 = vmatprep.subr.mxu0 0.0
        %473 = vmatpush2.msra.mxu0 0.0
        %474 = vmatprep.subr.mxu0 0.0
        %475 = vmatpush2.msra.mxu0 0.0
        %476 = vmatprep.subr.mxu0 0.0
        %477 = vmatpush2.msra.mxu0 0.0
        %478 = vmatprep.subr.mxu0 0.0
        %479 = vmatpush2.msra.mxu0 0.0
        %480 = vmatprep.subr.mxu0 0.0
        %481 = vmatpush2.msra.mxu0 0.0
        %482 = vmatprep.mubr.f32.mxu0 0.0
        %483 = vmatmul.mubr.f32.gmra.mxu0 %v328
        %v484 = vpop.f32.mrf.mxu0
        %v485 = vadd.f32 %v416, %v484
        %v486 = vpop.f32.mrf.mxu0
        %487 = vmatprep.mubr.f32.mxu0 0.0
        %488 = vmatmul.mubr.f32.gmra.mxu0 %v331
        %v489 = vpop.f32.mrf.mxu0
        %v490 = vadd.f32 %v416, %v489
        %v491 = vpop.f32.mrf.mxu0
        %492 = vdwg.mxu0
        %vm493 = vcmask 261120
        %494 = vst.msk [vmem:[%s308 + $0x10] sm:$0xff] %vm493, 0.0
        %495 = vst.msk [vmem:[%s308 + $0x18] sm:$0xff] %vm493, 0.0
        %496 = vst.msk [vmem:[%s308 + $0x20] sm:$0xff] %vm493, 0.0
        %497 = vst.msk [vmem:[%s308 + $0x28] sm:$0xff] %vm493, 0.0
        %498 = vst.msk [vmem:[%s308 + $0x30] sm:$0xff] %vm493, 0.0
        %499 = vst.msk [vmem:[%s308 + $0x38] sm:$0xff] %vm493, 0.0
        %500 = vst.msk [vmem:[%s308 + $0x40] sm:$0xff] %vm493, 0.0
        %501 = vst.msk [vmem:[%s308 + $0x48] sm:$0xff] %vm493, 0.0
        %502 = vst.msk [vmem:[%s308 + $0x50] sm:$0xff] %vm493, 0.0
        %503 = vst.msk [vmem:[%s308 + $0x58] sm:$0xff] %vm493, 0.0
        %504 = vst.msk [vmem:[%s308 + $0x60] sm:$0xff] %vm493, 0.0
        %505 = vst.msk [vmem:[%s308 + $0x68] sm:$0xff] %vm493, 0.0
        %506 = vst.msk [vmem:[%s308 + $0x70] sm:$0xff] %vm493, 0.0
        %507 = vst.msk [vmem:[%s308 + $0x78] sm:$0xff] %vm493, 0.0
        %508 = vst.msk [vmem:[%s313 + $0x10] sm:$0xff] %vm493, 0.0
        %509 = vst.msk [vmem:[%s313 + $0x18] sm:$0xff] %vm493, 0.0
        %510 = vst.msk [vmem:[%s313 + $0x20] sm:$0xff] %vm493, 0.0
        %511 = vst.msk [vmem:[%s313 + $0x28] sm:$0xff] %vm493, 0.0
        %512 = vst.msk [vmem:[%s313 + $0x30] sm:$0xff] %vm493, 0.0
        %513 = vst.msk [vmem:[%s313 + $0x38] sm:$0xff] %vm493, 0.0
        %514 = vst.msk [vmem:[%s313 + $0x40] sm:$0xff] %vm493, 0.0
        %515 = vst.msk [vmem:[%s313 + $0x48] sm:$0xff] %vm493, 0.0
        %516 = vst.msk [vmem:[%s313 + $0x50] sm:$0xff] %vm493, 0.0
        %517 = vst.msk [vmem:[%s313 + $0x58] sm:$0xff] %vm493, 0.0
        %518 = vst.msk [vmem:[%s313 + $0x60] sm:$0xff] %vm493, 0.0
        %519 = vst.msk [vmem:[%s313 + $0x68] sm:$0xff] %vm493, 0.0
        %520 = vst.msk [vmem:[%s313 + $0x70] sm:$0xff] %vm493, 0.0
        %521 = vst.msk [vmem:[%s313 + $0x78] sm:$0xff] %vm493, 0.0
        %522 = vst.msk [vmem:[%s308] sm:$0xff] %vm493, %v400
        %523 = vst.msk [vmem:[%s308 + $0x8] sm:$0xff] %vm493, %v405
        %524 = vst.msk [vmem:[%s313] sm:$0xff] %vm493, %v485
        %525 = vst.msk [vmem:[%s313 + $0x8] sm:$0xff] %vm493, %v490
        %p526 = scmp.lt.s32.totalorder %s22, 1
        %s527 = scalar_select %p526, %s22, 1
        %s528 = smul.addr %s527, 16
        %s529 = smul.addr %s528, 8
        %s530 = scalar_lea.vmem %s5, %s529
        %p531 = scmp.lt.s32.totalorder %s22, 1
        %s532 = scalar_select %p531, %s22, 1
        %s533 = smul.addr %s532, 16
        %s534 = smul.addr %s533, 8
        %s535 = scalar_lea.vmem %s6, %s534
        // Predicated region
        $region53: #{tpu_custom_call.1} parent=39 // pred_check
          %p536 = pneg %p150
        $region54: #{tpu_custom_call.1} parent=39 // pred_check_branch
          %538 = sbr.rel (%p536) target = $region56
        $region55: #{tpu_custom_call.1} parent=39 // pred_region
          _
        $region56: #{tpu_custom_call.1} parent=39 // pred_fallthru
          _
        // Predicated region
        $region57: #{tpu_custom_call.1} parent=39 // pred_check
          %p539 = pneg %p176
        $region58: #{tpu_custom_call.1} parent=39 // pred_check_branch
          %541 = sbr.rel (%p539) target = $region60
        $region59: #{tpu_custom_call.1} parent=39 // pred_region
          _
        $region60: #{tpu_custom_call.1} parent=39 // pred_fallthru
          _
      $region40: #{tpu_custom_call.1} parent=5 // pred_fallthru
        _
      %p542 = scmp.le.s32.totalorder 2, %s17
      // Predicated region
      $region61: #{tpu_custom_call.1} parent=5 // pred_check
        %p543 = pneg %p542
      $region62: #{tpu_custom_call.1} parent=5 // pred_check_branch
        %545 = sbr.rel (%p543) target = $region64
      $region63: #{tpu_custom_call.1} parent=5 // pred_region
        %s546 = ssub.s32 %s17, 2
        // Predicated region
        $region65: #{tpu_custom_call.1} parent=63 // pred_check
          %p547 = pneg %p156
        $region66: #{tpu_custom_call.1} parent=63 // pred_check_branch
          %549 = sbr.rel (%p547) target = $region68
        $region67: #{tpu_custom_call.1} parent=63 // pred_region
          %p550 = scmp.lt.s32.totalorder %s23, 1
          %s551 = scalar_select %p550, %s23, 1
          %s552 = smul.addr %s551, 16
          %s553 = smul.addr %s552, 8
          %s554 = scalar_lea.vmem %s5, %s553
        $region68: #{tpu_custom_call.1} parent=63 // pred_fallthru
          _
        // Predicated region
        $region69: #{tpu_custom_call.1} parent=63 // pred_check
          %p555 = pneg %p182
        $region70: #{tpu_custom_call.1} parent=63 // pred_check_branch
          %557 = sbr.rel (%p555) target = $region72
        $region71: #{tpu_custom_call.1} parent=63 // pred_region
          %p558 = scmp.lt.s32.totalorder %s23, 1
          %s559 = scalar_select %p558, %s23, 1
          %s560 = smul.addr %s559, 16
          %s561 = smul.addr %s560, 8
          %s562 = scalar_lea.vmem %s6, %s561
        $region72: #{tpu_custom_call.1} parent=63 // pred_fallthru
          _
      $region64: #{tpu_custom_call.1} parent=5 // pred_fallthru
        _
    $region6: #{tpu_custom_call.1} parent=1 // loop_footer
      %s21 = sadd.s32 1, %s17
    $region7: #{tpu_custom_call.1} parent=1 // loop_footer_branch
      %16 = sbr.rel target = $region3
    $region8: #{tpu_custom_call.1} parent=1 // loop_exit
      _
    %563 = vsyncpa [#allocation3], 1
    %s564 = scalar_lea.sflag [#allocation3], 1
    %565 = vsyncpa %s564, 1
    %566 = vsyncpa [#allocation5], 1

</llo_original>
